<compile_context>
chip_gen: v6e
topology: v6e:2x2x1
jax: 0.10.0
libtpu: 0.0.40
codegen_flags: <defaults>
</compile_context>

<pallas_src>
import functools

import jax
import jax.numpy as jnp
from jax.experimental import pallas as pl
from jax.experimental.pallas import tpu as pltpu


_VMEM_LIMIT = 48 * 1024 * 1024   # safe on v5e/v6e (128 MiB VMEM) and v7x (64 MiB/TC)


# ----------------------------------------------------------------------------
# Kernel 1: fused Frobenius norms of both feature tensors -> inverse norms.
# ----------------------------------------------------------------------------
def _inv_norms_kernel(s_ref, t_ref, os_ref, ot_ref, acc_s, acc_t, *,
                      rows_s, rows_t, nt_s, nt_t, grid_n):
    i = pl.program_id(0)

    @pl.when(i == 0)
    def _():
        acc_s[...] = jnp.zeros_like(acc_s)
        acc_t[...] = jnp.zeros_like(acc_t)

    def _accum(x_ref, acc_ref, rows_total):
        x = x_ref[...].astype(jnp.float32)
        tile_r, lane = x.shape
        if rows_total % tile_r != 0:          # static: tail rows need masking
            row = jax.lax.broadcasted_iota(jnp.int32, x.shape, 0) + i * tile_r
            x = jnp.where(row < rows_total, x, 0.0)
        xsq = x * x
        if tile_r % 8 == 0:
            # Fold rows into the (8, lane) accumulator with pure VPU adds.
            acc_ref[...] += xsq.reshape(-1, 8, lane).sum(axis=0)
        else:
            # tile_r == rows_total (single tile, not sublane-aligned).
            acc_ref[...] += jnp.sum(xsq, axis=0, keepdims=True)

    # When one feature has fewer tiles its block index is clamped by the
    # index_map (buffer stays resident, no extra DMA) and the work is skipped.
    if nt_s == grid_n:
        _accum(s_ref, acc_s, rows_s)
    else:
        @pl.when(i < nt_s)
        def _():
            _accum(s_ref, acc_s, rows_s)

    if nt_t == grid_n:
        _accum(t_ref, acc_t, rows_t)
    else:
        @pl.when(i < nt_t)
        def _():
            _accum(t_ref, acc_t, rows_t)

    @pl.when(i == grid_n - 1)
    def _():
        def _finish(acc_ref, o_ref):
            ssq = jnp.sum(acc_ref[...], keepdims=True)     # (1, 1)
            r = jax.lax.rsqrt(ssq)
            r = r * (1.5 - 0.5 * ssq * r * r)              # Newton -> full f32
            o_ref[...] = r                                 # 1 / ||feature||_F
        _finish(acc_s, os_ref)
        _finish(acc_t, ot_ref)


def _as_2d(x):
    """Copy-free 2D view for the sum-of-squares reduction (no jnp.pad pass)."""
    n = x.size
    if n % 128 == 0:
        return x.reshape(n // 128, 128)
    # TODO(synk): when numel % 128 != 0 the lanes are under-filled; still avoids
    # an extra full-tensor HBM pad copy.
    return x.reshape(-1, x.shape[-1])


def _row_tile(rows, lane, budget_bytes=2 * 1024 * 1024):
    """Largest sublane-aligned row tile whose padded f32 block fits the budget."""
    lane_pad = ((lane + 127) // 128) * 128
    cap = max(8, (budget_bytes // (4 * lane_pad)) // 8 * 8)
    return rows if rows <= cap else cap


def _feature_inv_norms(student_feature, teacher_feature):
    s2d = _as_2d(student_feature)
    t2d = _as_2d(teacher_feature)
    rows_s, lane_s = s2d.shape
    rows_t, lane_t = t2d.shape
    tr_s = _row_tile(rows_s, lane_s)
    tr_t = _row_tile(rows_t, lane_t)
    nt_s = pl.cdiv(rows_s, tr_s)
    nt_t = pl.cdiv(rows_t, tr_t)
    grid_n = max(nt_s, nt_t)

    s_map = (lambda i: (i, 0)) if nt_s == grid_n else (
        lambda i: (jnp.minimum(i, nt_s - 1), 0))
    t_map = (lambda i: (i, 0)) if nt_t == grid_n else (
        lambda i: (jnp.minimum(i, nt_t - 1), 0))

    acc_s_shape = (8, lane_s) if tr_s % 8 == 0 else (1, lane_s)
    acc_t_shape = (8, lane_t) if tr_t % 8 == 0 else (1, lane_t)

    kernel = functools.partial(_inv_norms_kernel, rows_s=rows_s, rows_t=rows_t,
                               nt_s=nt_s, nt_t=nt_t, grid_n=grid_n)
    return pl.pallas_call(
        kernel,
        out_shape=(jax.ShapeDtypeStruct((1, 1), jnp.float32),
                   jax.ShapeDtypeStruct((1, 1), jnp.float32)),
        grid=(grid_n,),
        in_specs=[pl.BlockSpec((tr_s, lane_s), s_map),
                  pl.BlockSpec((tr_t, lane_t), t_map)],
        out_specs=(pl.BlockSpec((1, 1), lambda i: (0, 0)),
                   pl.BlockSpec((1, 1), lambda i: (0, 0))),
        scratch_shapes=[pltpu.VMEM(acc_s_shape, jnp.float32),
                        pltpu.VMEM(acc_t_shape, jnp.float32)],
        compiler_params=pltpu.CompilerParams(
            dimension_semantics=("arbitrary",),
            vmem_limit_bytes=_VMEM_LIMIT),
    )(s2d, t2d)


# ----------------------------------------------------------------------------
# Kernel 2: FNKD soft cross-entropy over the channel (sublane) axis, NCHW
# native layout, per-position partials accumulated over spatial tiles.
# ----------------------------------------------------------------------------
def _fnkd_ce_kernel(inv_s_ref, inv_t_ref, s_ref, t_ref, o_ref, acc_ref, *,
                    hw_total, mask_hw):
    j = pl.program_id(1)

    @pl.when(j == 0)
    def _():
        acc_ref[...] = jnp.zeros_like(acc_ref)

    # (C, tile_hw): channels on sublanes, spatial positions on lanes.
    s = s_ref[0].astype(jnp.float32) * inv_s_ref[0, 0]   # student / ||f_s||
    t = t_ref[0].astype(jnp.float32) * inv_t_ref[0, 0]   # teacher / ||f_t||

    # Algebraic form of  -sum_c softmax(t)_c * log_softmax(s)_c :
    #   per_pos = logZ_s - (1/Z_t) * sum_c exp(t_shift)_c * s_shift_c
    # (uses sum_c softmax(t)_c == 1; the extra log_softmax inside
    #  nn.CrossEntropyLoss is idempotent on q_fn).
    s_shift = s - jnp.max(s, axis=0, keepdims=True)
    log_z_s = jnp.log(jnp.sum(jnp.exp(s_shift), axis=0, keepdims=True))

    t_exp = jnp.exp(t - jnp.max(t, axis=0, keepdims=True))
    z_t = jnp.sum(t_exp, axis=0, keepdims=True)
    inv_z = pl.reciprocal(z_t, approx=True)
    inv_z = inv_z * (2.0 - z_t * inv_z)          # Newton -> full f32 accuracy

    dot = jnp.sum(t_exp * s_shift, axis=0, keepdims=True)
    per_pos = log_z_s - dot * inv_z              # (1, tile_hw)

    if mask_hw:
        tile_hw = per_pos.shape[-1]
        col = jax.lax.broadcasted_iota(jnp.int32, per_pos.shape, 1) + j * tile_hw
        # Keep this as a select: out-of-bounds columns may hold garbage/Inf/NaN.
        per_pos = jnp.where(col < hw_total, per_pos, 0.0)

    acc_ref[...] += per_pos                      # elementwise VPU accumulation

    @pl.when(j == pl.num_programs(1) - 1)
    def _():
        part = jnp.sum(acc_ref[...])             # this image's positions
        o_ref[...] = jnp.broadcast_to(part, o_ref.shape)   # lane-dense store


def _choose_tile_hw(hw, c, budget_bytes=4 * 1024 * 1024, lane=128):
    """Largest spatial tile whose sublane-padded f32 block fits the budget.
    Prefers a multiple of 128 that divides HW so the mask path compiles out."""
    c_pad = ((c + 7) // 8) * 8
    cap = max(lane, (budget_bytes // (4 * c_pad)) // lane * lane)
    if hw <= cap:
        return hw
    for t in range(cap, lane - 1, -lane):
        if hw % t == 0:
            return t
    return cap


def fnkd_loss(student_outputs, teacher_outputs, student_feature, teacher_feature,
              loss_weight=1.0):
    N, C, H, W = student_outputs.shape
    assert teacher_outputs.shape == (N, C, H, W)
    HW = H * W

    # NCHW-native: only collapse the spatial dims (no transpose copy).
    s3 = student_outputs.reshape(N, C, HW)
    t3 = teacher_outputs.reshape(N, C, HW)

    # Fused Frobenius-norm kernel: one launch; its (1,1) inverse-norm outputs
    # are fed straight into the CE kernel through SMEM (no intervening XLA ops).
    inv_s, inv_t = _feature_inv_norms(student_feature, teacher_feature)

    tile_hw = _choose_tile_hw(HW, C)
    n_hw = pl.cdiv(HW, tile_hw)
    mask_hw = (HW % tile_hw) != 0

    # TODO(synk): on v7x with N == 1 both TensorCores only stay busy if the
    # spatial axis is also split onto a leading "parallel" grid axis.
    # TODO(synk): optionally sweep pipeline_mode=pl.Buffered(3) on the two
    # logits inputs; default double-buffering is kept here for portability.
    kernel = functools.partial(_fnkd_ce_kernel, hw_total=HW, mask_hw=mask_hw)
    partials = pl.pallas_call(
        kernel,
        out_shape=jax.ShapeDtypeStruct((N, 1, 128), jnp.float32),
        grid=(N, n_hw),
        in_specs=[
            pl.BlockSpec(memory_space=pltpu.SMEM),                 # 1/||f_s||
            pl.BlockSpec(memory_space=pltpu.SMEM),                 # 1/||f_t||
            pl.BlockSpec((1, C, tile_hw), lambda n, j: (n, 0, j)),
            pl.BlockSpec((1, C, tile_hw), lambda n, j: (n, 0, j)),
        ],
        out_specs=pl.BlockSpec((1, 1, 128), lambda n, j: (n, 0, 0)),
        scratch_shapes=[pltpu.VMEM((1, tile_hw), jnp.float32)],
        compiler_params=pltpu.CompilerParams(
            dimension_semantics=("parallel", "arbitrary"),
            vmem_limit_bytes=_VMEM_LIMIT),
    )(inv_s, inv_t, s3, t3)

    # Mean over all N*H*W positions, then loss_weight (jnp arithmetic so a
    # traced loss_weight also works).
    return (loss_weight / (N * HW)) * jnp.sum(partials[:, 0, 0])


# ----------------------------------------------------------------------------
# Pure-JAX reference (mirrors the PyTorch forward exactly).
# ----------------------------------------------------------------------------
def fnkd_ref(student_outputs, teacher_outputs, student_feature, teacher_feature,
             loss_weight=1.0):
    s_norm = jnp.sqrt(jnp.sum(student_feature.astype(jnp.float32) ** 2))
    t_norm = jnp.sqrt(jnp.sum(teacher_feature.astype(jnp.float32) ** 2))
    q_fn = jax.nn.log_softmax(student_outputs / s_norm, axis=1)
    to_kd = jax.nn.softmax(teacher_outputs / t_norm, axis=1)
    logq = jax.nn.log_softmax(q_fn, axis=1)   # idempotent (CrossEntropyLoss)
    per_pos = -jnp.sum(to_kd * logq, axis=1)
    return loss_weight * jnp.mean(per_pos)


if __name__ == "__main__":
    key = jax.random.PRNGKey(0)
    k1, k2, k3, k4 = jax.random.split(key, 4)

    # Segmentation-style shapes: logits (N, C, H, W); features may have
    # different channel counts than the logits.
    student_outputs = jax.random.normal(k1, (2, 4, 16, 16), jnp.float32)
    teacher_outputs = jax.random.normal(k2, (2, 4, 16, 16), jnp.float32)
    student_feature = jax.random.normal(k3, (2, 8, 16, 16), jnp.float32)
    teacher_feature = jax.random.normal(k4, (2, 16, 16, 16), jnp.float32)

    loss = fnkd_loss(student_outputs, teacher_outputs,
                     student_feature, teacher_feature, loss_weight=1.0)
    loss = jax.block_until_ready(loss)

    ref = fnkd_ref(student_outputs, teacher_outputs,
                   student_feature, teacher_feature, loss_weight=1.0)
    assert jnp.allclose(loss, ref, rtol=1e-4, atol=1e-6), (loss, ref)

    print("KERNEL_OK")
</pallas_src>

<mosaic_0001>
module attributes {stable_mosaic.version = 11 : i64} {
  func.func @_inv_norms_kernel(%arg0: i32, %arg1: memref<32x128xf32, #tpu.memory_space<vmem>>, %arg2: memref<64x128xf32, #tpu.memory_space<vmem>>, %arg3: memref<1x1xf32, #tpu.memory_space<vmem>>, %arg4: memref<1x1xf32, #tpu.memory_space<vmem>>, %arg5: memref<8x128xf32, #tpu.memory_space<vmem>>, %arg6: memref<8x128xf32, #tpu.memory_space<vmem>>) attributes {dimension_semantics = [#tpu.dimension_semantics<arbitrary>], iteration_bounds = array<i64: 1>, scalar_prefetch = 0 : i64, scratch_operands = 2 : i64, tpu.core_type = #tpu.core_type<tc>, window_params = [{transform_indices = @transform_0, window_bounds = array<i64: 32, 128>}, {transform_indices = @transform_1, window_bounds = array<i64: 64, 128>}, {pipeline_mode = #tpu.pipeline_mode<synchronous>, transform_indices = @transform_2, window_bounds = array<i64: 1, 1>}, {pipeline_mode = #tpu.pipeline_mode<synchronous>, transform_indices = @transform_3, window_bounds = array<i64: 1, 1>}]} {
    %c0_i32 = arith.constant 0 : i32
    %0 = arith.cmpi eq, %arg0, %c0_i32 : i32
    %1 = arith.extui %0 : i1 to i32
    %c0_i32_0 = arith.constant 0 : i32
    %2 = arith.cmpi ne, %1, %c0_i32_0 : i32
    scf.if %2 {
      %cst_15 = arith.constant 0.000000e+00 : f32
      %20 = vector.broadcast %cst_15 : f32 to vector<8x128xf32>
      %c0_16 = arith.constant 0 : index
      %c0_17 = arith.constant 0 : index
      %21 = vector.load %arg5[%c0_16, %c0_17] : memref<8x128xf32, #tpu.memory_space<vmem>>, vector<8x128xf32>
      tpu.vector_store %arg5[%c0_16, %c0_17], %20 {strides = array<i32>} : memref<8x128xf32, #tpu.memory_space<vmem>>, vector<8x128xf32>,
      %cst_18 = arith.constant 0.000000e+00 : f32
      %22 = vector.broadcast %cst_18 : f32 to vector<8x128xf32>
      %c0_19 = arith.constant 0 : index
      %c0_20 = arith.constant 0 : index
      %23 = vector.load %arg6[%c0_19, %c0_20] : memref<8x128xf32, #tpu.memory_space<vmem>>, vector<8x128xf32>
      tpu.vector_store %arg6[%c0_19, %c0_20], %22 {strides = array<i32>} : memref<8x128xf32, #tpu.memory_space<vmem>>, vector<8x128xf32>,
    } else {
    }
    %c0 = arith.constant 0 : index
    %c0_1 = arith.constant 0 : index
    %3 = vector.load %arg1[%c0, %c0_1] : memref<32x128xf32, #tpu.memory_space<vmem>>, vector<32x128xf32>
    %4 = arith.mulf %3, %3 : vector<32x128xf32>
    %c0_2 = arith.constant 0 : index
    %c0_3 = arith.constant 0 : index
    %5 = vector.load %arg5[%c0_2, %c0_3] : memref<8x128xf32, #tpu.memory_space<vmem>>, vector<8x128xf32>
    %6 = vector.shape_cast %4 : vector<32x128xf32> to vector<4x8x128xf32>
    %cst = arith.constant dense<0.000000e+00> : vector<8x128xf32>
    %7 = vector.multi_reduction <add>, %6, %cst [0] : vector<4x8x128xf32> to vector<8x128xf32>
    %8 = arith.addf %5, %7 : vector<8x128xf32>
    %c0_4 = arith.constant 0 : index
    %c0_5 = arith.constant 0 : index
    %9 = vector.load %arg5[%c0_4, %c0_5] : memref<8x128xf32, #tpu.memory_space<vmem>>, vector<8x128xf32>
    tpu.vector_store %arg5[%c0_4, %c0_5], %8 {strides = array<i32>} : memref<8x128xf32, #tpu.memory_space<vmem>>, vector<8x128xf32>,
    %c0_6 = arith.constant 0 : index
    %c0_7 = arith.constant 0 : index
    %10 = vector.load %arg2[%c0_6, %c0_7] : memref<64x128xf32, #tpu.memory_space<vmem>>, vector<64x128xf32>
    %11 = arith.mulf %10, %10 : vector<64x128xf32>
    %c0_8 = arith.constant 0 : index
    %c0_9 = arith.constant 0 : index
    %12 = vector.load %arg6[%c0_8, %c0_9] : memref<8x128xf32, #tpu.memory_space<vmem>>, vector<8x128xf32>
    %13 = vector.shape_cast %11 : vector<64x128xf32> to vector<8x8x128xf32>
    %cst_10 = arith.constant dense<0.000000e+00> : vector<8x128xf32>
    %14 = vector.multi_reduction <add>, %13, %cst_10 [0] : vector<8x8x128xf32> to vector<8x128xf32>
    %15 = arith.addf %12, %14 : vector<8x128xf32>
    %c0_11 = arith.constant 0 : index
    %c0_12 = arith.constant 0 : index
    %16 = vector.load %arg6[%c0_11, %c0_12] : memref<8x128xf32, #tpu.memory_space<vmem>>, vector<8x128xf32>
    tpu.vector_store %arg6[%c0_11, %c0_12], %15 {strides = array<i32>} : memref<8x128xf32, #tpu.memory_space<vmem>>, vector<8x128xf32>,
    %c0_i32_13 = arith.constant 0 : i32
    %17 = arith.cmpi eq, %arg0, %c0_i32_13 : i32
    %18 = arith.extui %17 : i1 to i32
    %c0_i32_14 = arith.constant 0 : i32
    %19 = arith.cmpi ne, %18, %c0_i32_14 : i32
    scf.if %19 {
      %c0_15 = arith.constant 0 : index
      %c0_16 = arith.constant 0 : index
      %20 = vector.load %arg5[%c0_15, %c0_16] : memref<8x128xf32, #tpu.memory_space<vmem>>, vector<8x128xf32>
      %21 = vector.shape_cast %20 : vector<8x128xf32> to vector<1x8x128xf32>
      %cst_17 = arith.constant dense<0.000000e+00> : vector<1xf32>
      %22 = vector.multi_reduction <add>, %21, %cst_17 [1, 2] : vector<1x8x128xf32> to vector<1xf32>
      %23 = vector.shape_cast %22 : vector<1xf32> to vector<1x1x1xf32>
      %24 = vector.extract %23[0, 0, 0] : f32 from vector<1x1x1xf32>
      %25 = vector.broadcast %24 : f32 to vector<1x1xf32>
      %26 = math.rsqrt %25 : vector<1x1xf32>
      %cst_18 = arith.constant 5.000000e-01 : f32
      %27 = vector.broadcast %cst_18 : f32 to vector<1x1xf32>
      %28 = arith.mulf %27, %25 : vector<1x1xf32>
      %29 = arith.mulf %28, %26 : vector<1x1xf32>
      %30 = arith.mulf %29, %26 : vector<1x1xf32>
      %cst_19 = arith.constant 1.500000e+00 : f32
      %31 = vector.broadcast %cst_19 : f32 to vector<1x1xf32>
      %32 = arith.subf %31, %30 : vector<1x1xf32>
      %33 = arith.mulf %26, %32 : vector<1x1xf32>
      %c0_20 = arith.constant 0 : index
      %c0_21 = arith.constant 0 : index
      %34 = vector.load %arg3[%c0_20, %c0_21] : memref<1x1xf32, #tpu.memory_space<vmem>>, vector<1x1xf32>
      tpu.vector_store %arg3[%c0_20, %c0_21], %33 {strides = array<i32>} : memref<1x1xf32, #tpu.memory_space<vmem>>, vector<1x1xf32>,
      %c0_22 = arith.constant 0 : index
      %c0_23 = arith.constant 0 : index
      %35 = vector.load %arg6[%c0_22, %c0_23] : memref<8x128xf32, #tpu.memory_space<vmem>>, vector<8x128xf32>
      %36 = vector.shape_cast %35 : vector<8x128xf32> to vector<1x8x128xf32>
      %cst_24 = arith.constant dense<0.000000e+00> : vector<1xf32>
      %37 = vector.multi_reduction <add>, %36, %cst_24 [1, 2] : vector<1x8x128xf32> to vector<1xf32>
      %38 = vector.shape_cast %37 : vector<1xf32> to vector<1x1x1xf32>
      %39 = vector.extract %38[0, 0, 0] : f32 from vector<1x1x1xf32>
      %40 = vector.broadcast %39 : f32 to vector<1x1xf32>
      %41 = math.rsqrt %40 : vector<1x1xf32>
      %cst_25 = arith.constant 5.000000e-01 : f32
      %42 = vector.broadcast %cst_25 : f32 to vector<1x1xf32>
      %43 = arith.mulf %42, %40 : vector<1x1xf32>
      %44 = arith.mulf %43, %41 : vector<1x1xf32>
      %45 = arith.mulf %44, %41 : vector<1x1xf32>
      %cst_26 = arith.constant 1.500000e+00 : f32
      %46 = vector.broadcast %cst_26 : f32 to vector<1x1xf32>
      %47 = arith.subf %46, %45 : vector<1x1xf32>
      %48 = arith.mulf %41, %47 : vector<1x1xf32>
      %c0_27 = arith.constant 0 : index
      %c0_28 = arith.constant 0 : index
      %49 = vector.load %arg4[%c0_27, %c0_28] : memref<1x1xf32, #tpu.memory_space<vmem>>, vector<1x1xf32>
      tpu.vector_store %arg4[%c0_27, %c0_28], %48 {strides = array<i32>} : memref<1x1xf32, #tpu.memory_space<vmem>>, vector<1x1xf32>,
    } else {
    }
    return
  }
  func.func @transform_0(%arg0: i32) -> (i32, i32) {
    %c0_i32 = arith.constant 0 : i32
    %c0_i32_0 = arith.constant 0 : i32
    return %arg0, %c0_i32 : i32, i32
  }
  func.func @transform_1(%arg0: i32) -> (i32, i32) {
    %c0_i32 = arith.constant 0 : i32
    %c0_i32_0 = arith.constant 0 : i32
    return %arg0, %c0_i32 : i32, i32
  }
  func.func @transform_2(%arg0: i32) -> (i32, i32) {
    %c0_i32 = arith.constant 0 : i32
    %c0_i32_0 = arith.constant 0 : i32
    %c0_i32_1 = arith.constant 0 : i32
    return %c0_i32, %c0_i32_0 : i32, i32
  }
  func.func @transform_3(%arg0: i32) -> (i32, i32) {
    %c0_i32 = arith.constant 0 : i32
    %c0_i32_0 = arith.constant 0 : i32
    %c0_i32_1 = arith.constant 0 : i32
    return %c0_i32, %c0_i32_0 : i32, i32
  }
}

</mosaic_0001>

<llo_original>
// kernel: tpu_custom_call.1
$region0: #{tpu_custom_call.1}
  #allocation0 [shape = 'u32[]', space=smem, size = 0x4, offset = 0x4, fixed_abs, tag = 'smem constant byte address 0x4 - core index']
  #allocation1 [shape = 'u32[144,128]{1,0:T(1,128)}', space=vmem, size = 0x12000, scoped, tag = 'internal scratch']
  #allocation2 [shape = 'f32[8,128]{1,0:T(8,128)}', space=vmem, size = 0x1000, scoped, tag = 'scratch operand']
  #allocation3 [shape = 'f32[8,128]{1,0:T(8,128)}', space=vmem, size = 0x1000, scoped, tag = 'scratch operand']
  %s0 = inlined_call_operand.hbm [shape: f32[32,128], index: 0, kind: input, shape index: {}]
  %s1 = inlined_call_operand.hbm [shape: f32[64,128], index: 1, kind: input, shape index: {}]
  %s2 = inlined_call_operand.hbm [shape: f32[1,1], index: 2, kind: output, shape index: {0}]
  %s3 = inlined_call_operand.hbm [shape: f32[1,1], index: 3, kind: output, shape index: {1}]
  %4 = xla_tuple %s2, %s3
  %s5 = sld [smem:[#allocation0]]
  $region42: #{tpu_custom_call.1} parent=0
    _
  %s7 = ssub.s32 1, %s5
  %s8 = scalar_select 0, %s7, %s5
  $region1: #{tpu_custom_call.1} parent=0
    #allocation4 [shape = 'u8[16384]{0}', space=vmem, size = 0x4000, scoped, tag = 'input window, operand 0, single buffered']
    #allocation5 [shape = 's32[1]{0}', space=sflag, size = 0x4, scoped, tag = 'scoped memory for tpu_custom_call.1']
    #allocation6 [shape = 's32[1]{0}', space=sflag, size = 0x4, scoped, tag = 'scoped memory for tpu_custom_call.1']
    #allocation7 [shape = 'u8[32768]{0}', space=vmem, size = 0x8000, scoped, tag = 'input window, operand 1, single buffered']
    #allocation8 [shape = 's32[1]{0}', space=sflag, size = 0x4, scoped, tag = 'scoped memory for tpu_custom_call.1']
    #allocation9 [shape = 'u8[512]{0}', space=vmem, size = 0x400, scoped, tag = 'output window, operand 0, single buffered']
    #allocation10 [shape = 'u8[512]{0}', space=vmem, size = 0x400, scoped, tag = 'output window, operand 1, single buffered']
    #allocation11 [shape = 's32[1]{0}', space=sflag, size = 0x4, scoped, tag = 'scoped memory for tpu_custom_call.1']
    %9 = vsyncpa [#allocation5], 0
    %10 = vsyncpa [#allocation8], 0
    %11 = vsyncpa [#allocation6], 0
    %12 = vsyncpa [#allocation11], 0
    // Predicated region
    $region2: #{tpu_custom_call.1} parent=1 // pred_check
      _
    $region3: #{tpu_custom_call.1} parent=1 // pred_check_branch
      %14 = sbr.rel (0) target = $region5
    $region4: #{tpu_custom_call.1} parent=1 // pred_region
      %s16 = ssub.s32 512, 512
      %17 = vsyncadd [#allocation5], %s16
      %s18 = sshll.u32 [#allocation4], 4
      %s19 = int_to_ptr.vmem [resolvable:$true] %s18
      %24 = dma.hbm_to_vmem [thread:$0]  %s0, 512, %s19, [#allocation5], 128, 128, 8
    $region5: #{tpu_custom_call.1} parent=1 // pred_fallthru
      _
    // Predicated region
    $region6: #{tpu_custom_call.1} parent=1 // pred_check
      _
    $region7: #{tpu_custom_call.1} parent=1 // pred_check_branch
      %26 = sbr.rel (0) target = $region9
    $region8: #{tpu_custom_call.1} parent=1 // pred_region
      %s28 = ssub.s32 1024, 1024
      %29 = vsyncadd [#allocation8], %s28
      %s30 = sshll.u32 [#allocation7], 4
      %s31 = int_to_ptr.vmem [resolvable:$true] %s30
      %36 = dma.hbm_to_vmem [thread:$0]  %s1, 1024, %s31, [#allocation8], 128, 128, 8
    $region9: #{tpu_custom_call.1} parent=1 // pred_fallthru
      _
    // Predicated region
    $region10: #{tpu_custom_call.1} parent=1 // pred_check
      _
    $region11: #{tpu_custom_call.1} parent=1 // pred_check_branch
      %38 = sbr.rel (0) target = $region13
    $region12: #{tpu_custom_call.1} parent=1 // pred_region
      %39 = dma.done [#allocation5], 512
    $region13: #{tpu_custom_call.1} parent=1 // pred_fallthru
      _
    // Predicated region
    $region14: #{tpu_custom_call.1} parent=1 // pred_check
      _
    $region15: #{tpu_custom_call.1} parent=1 // pred_check_branch
      %41 = sbr.rel (0) target = $region17
    $region16: #{tpu_custom_call.1} parent=1 // pred_region
      %42 = dma.done [#allocation8], 1024
    $region17: #{tpu_custom_call.1} parent=1 // pred_fallthru
      _
    %p43 = scmp.eq.s32.totalorder 0, 0
    // Predicated region
    $region18: #{tpu_custom_call.1} parent=1 // pred_check
      %p44 = pneg %p43
    $region19: #{tpu_custom_call.1} parent=1 // pred_check_branch
      %46 = sbr.rel (%p44) target = $region21
    $region20: #{tpu_custom_call.1} parent=1 // pred_region
      %47 = vst [vmem:[#allocation2] sm:$0xff] 0.0
      %48 = vst [vmem:[#allocation3] sm:$0xff] 0.0
    $region21: #{tpu_custom_call.1} parent=1 // pred_fallthru
      _
    %v49 = vld [vmem:[#allocation4] sm:$0xff]
    %v50 = vld [vmem:[#allocation4 + $0x8] sm:$0xff]
    %v51 = vld [vmem:[#allocation4 + $0x10] sm:$0xff]
    %v52 = vld [vmem:[#allocation4 + $0x18] sm:$0xff]
    %v53 = vmul.f32 %v49, %v49
    %v54 = vmul.f32 %v50, %v50
    %v55 = vmul.f32 %v51, %v51
    %v56 = vmul.f32 %v52, %v52
    %v57 = vld [vmem:[#allocation2] sm:$0xff]
    %v58 = vadd.f32 %v53, %v54
    %v59 = vadd.f32 %v58, %v55
    %v60 = vadd.f32 %v59, %v56
    %v61 = vadd.f32 %v57, %v60
    %62 = vst [vmem:[#allocation2] sm:$0xff] %v61
    %v63 = vld [vmem:[#allocation7] sm:$0xff]
    %v64 = vld [vmem:[#allocation7 + $0x8] sm:$0xff]
    %v65 = vld [vmem:[#allocation7 + $0x10] sm:$0xff]
    %v66 = vld [vmem:[#allocation7 + $0x18] sm:$0xff]
    %v67 = vld [vmem:[#allocation7 + $0x20] sm:$0xff]
    %v68 = vld [vmem:[#allocation7 + $0x28] sm:$0xff]
    %v69 = vld [vmem:[#allocation7 + $0x30] sm:$0xff]
    %v70 = vld [vmem:[#allocation7 + $0x38] sm:$0xff]
    %v71 = vmul.f32 %v63, %v63
    %v72 = vmul.f32 %v64, %v64
    %v73 = vmul.f32 %v65, %v65
    %v74 = vmul.f32 %v66, %v66
    %v75 = vmul.f32 %v67, %v67
    %v76 = vmul.f32 %v68, %v68
    %v77 = vmul.f32 %v69, %v69
    %v78 = vmul.f32 %v70, %v70
    %v79 = vld [vmem:[#allocation3] sm:$0xff]
    %v80 = vadd.f32 %v71, %v72
    %v81 = vadd.f32 %v80, %v73
    %v82 = vadd.f32 %v81, %v74
    %v83 = vadd.f32 %v82, %v75
    %v84 = vadd.f32 %v83, %v76
    %v85 = vadd.f32 %v84, %v77
    %v86 = vadd.f32 %v85, %v78
    %v87 = vadd.f32 %v79, %v86
    %88 = vst [vmem:[#allocation3] sm:$0xff] %v87
    // Predicated region
    $region22: #{tpu_custom_call.1} parent=1 // pred_check
      %p89 = pneg %p43
    $region23: #{tpu_custom_call.1} parent=1 // pred_check_branch
      %91 = sbr.rel (%p89) target = $region25
    $region24: #{tpu_custom_call.1} parent=1 // pred_region
      %v92 = vld [vmem:[#allocation2] sm:$0xff]
      %93 = vadd.xlane.f32.xlu0 %v92
      %v94 = vpop.xlane.xlu0 %93
      %v95 = vrot.slane %v94, 4
      %v96 = vadd.f32 %v94, %v95
      %v97 = vrot.slane %v96, 2
      %v98 = vadd.f32 %v96, %v97
      %v99 = vrot.slane %v98, 1
      %v100 = vadd.f32 %v98, %v99
      %s101 = vtos %v100
      %v102 = vstv %s101
      %v103 = vrsqrt.pop %v102
      %v104 = vmul.f32 %v102, 0.5
      %v105 = vmul.f32 %v104, %v103
      %v106 = vmul.f32 %v105, %v103
      %v107 = vsub.f32 1.5, %v106
      %v108 = vmul.f32 %v103, %v107
      %vm109 = vcmask 0
      %110 = vst.msk [vmem:[#allocation9] sm:$0x1] %vm109, %v108
      %v111 = vld [vmem:[#allocation3] sm:$0xff]
      %112 = vadd.xlane.f32.xlu0 %v111
      %v113 = vpop.xlane.xlu0 %112
      %v114 = vrot.slane %v113, 4
      %v115 = vadd.f32 %v113, %v114
      %v116 = vrot.slane %v115, 2
      %v117 = vadd.f32 %v115, %v116
      %v118 = vrot.slane %v117, 1
      %v119 = vadd.f32 %v117, %v118
      %s120 = vtos %v119
      %v121 = vstv %s120
      %v122 = vrsqrt.pop %v121
      %v123 = vmul.f32 %v121, 0.5
      %v124 = vmul.f32 %v123, %v122
      %v125 = vmul.f32 %v124, %v122
      %v126 = vsub.f32 1.5, %v125
      %v127 = vmul.f32 %v122, %v126
      %128 = vst.msk [vmem:[#allocation10] sm:$0x1] %vm109, %v127
    $region25: #{tpu_custom_call.1} parent=1 // pred_fallthru
      _
    // Predicated region
    $region26: #{tpu_custom_call.1} parent=1 // pred_check
      _
    $region27: #{tpu_custom_call.1} parent=1 // pred_check_branch
      %130 = sbr.rel (0) target = $region29
    $region28: #{tpu_custom_call.1} parent=1 // pred_region
      %s132 = ssub.s32 16, 16
      %133 = vsyncadd [#allocation6], %s132
      %s135 = sshll.u32 [#allocation9], 4
      %s136 = int_to_ptr.vmem [resolvable:$true] %s135
      %138 = dma.vmem_to_hbm [thread:$0]  %s136, 16, %s2, [#allocation6]
    $region29: #{tpu_custom_call.1} parent=1 // pred_fallthru
      _
    // Predicated region
    $region30: #{tpu_custom_call.1} parent=1 // pred_check
      _
    $region31: #{tpu_custom_call.1} parent=1 // pred_check_branch
      %140 = sbr.rel (0) target = $region33
    $region32: #{tpu_custom_call.1} parent=1 // pred_region
      %s142 = ssub.s32 16, 16
      %143 = vsyncadd [#allocation11], %s142
      %s145 = sshll.u32 [#allocation10], 4
      %s146 = int_to_ptr.vmem [resolvable:$true] %s145
      %148 = dma.vmem_to_hbm [thread:$0]  %s146, 16, %s3, [#allocation11]
    $region33: #{tpu_custom_call.1} parent=1 // pred_fallthru
      _
    // Predicated region
    $region34: #{tpu_custom_call.1} parent=1 // pred_check
      _
    $region35: #{tpu_custom_call.1} parent=1 // pred_check_branch
      %150 = sbr.rel (0) target = $region37
    $region36: #{tpu_custom_call.1} parent=1 // pred_region
      %151 = dma.done [#allocation6], 16
    $region37: #{tpu_custom_call.1} parent=1 // pred_fallthru
      _
    // Predicated region
    $region38: #{tpu_custom_call.1} parent=1 // pred_check
      _
    $region39: #{tpu_custom_call.1} parent=1 // pred_check_branch
      %153 = sbr.rel (0) target = $region41
    $region40: #{tpu_custom_call.1} parent=1 // pred_region
      %154 = dma.done [#allocation11], 16
    $region41: #{tpu_custom_call.1} parent=1 // pred_fallthru
      _
    %155 = vsyncpa [#allocation5], 1
    %156 = vsyncpa [#allocation8], 1
    %157 = vsyncpa [#allocation6], 1
    %158 = vsyncpa [#allocation11], 1

</llo_original>
